<compile_context>
chip_gen: v7x
topology: tpu7x:2x2x1
jax: 0.10.0
libtpu: 0.0.40
codegen_flags: <defaults>
</compile_context>

<pallas_src>
import jax
import jax.numpy as jnp
from jax.experimental import pallas as pl
from jax.experimental.pallas import tpu as pltpu


def _gumbel_argmax_kernel(x_ref, u_ref, out_ref):
    # x_ref:   VMEM (1, C, TILE_T)  logits
    # u_ref:   VMEM (1, C, TILE_T)  uniform(0,1) noise
    # out_ref: VMEM (1, 1, TILE_T)  int32 sampled class indices (lane-dense)
    logits = x_ref[0].astype(jnp.float32)            # (C, TILE_T)
    u = u_ref[0].astype(jnp.float32)
    u = jnp.clip(u, jnp.float32(1e-7), jnp.float32(1.0 - 1e-7))

    # Gumbel-max scores.
    z = logits + (-jnp.log(-jnp.log(u)))             # (C, TILE_T)

    C = z.shape[0]
    # argmax over the sublane (C) axis; first index attaining the max.
    m = jnp.max(z, axis=0, keepdims=True)            # (1, TILE_T)
    idx = jax.lax.broadcasted_iota(jnp.int32, z.shape, 0)
    picked = jnp.where(z == m, idx, jnp.int32(C))
    out_ref[0] = jnp.min(picked, axis=0, keepdims=True)   # (1, TILE_T)


def _choose_tile_t(T):
    # Lane-axis tile: multiple of 128 if possible, otherwise the full extent
    # (full-extent blocks always satisfy the (8,128) layout rule).
    for cand in (512, 256, 128):
        if T % cand == 0:
            return cand
    return T


def categorical_sample(x, seed=0):
    """x: (B, C, T) or (C, T) unnormalized logits. Returns int32 samples (B, T)."""
    if x.ndim == 2:
        x = x[None]
    B, C, T = x.shape

    tile_t = _choose_tile_t(T)
    grid = (B, T // tile_t)

    # Uniform noise generated once outside the kernel (portable PRNG; no
    # per-tile reseed correlation). Same layout as the logits so it tiles
    # identically.
    key = jax.random.PRNGKey(seed)
    u = jax.random.uniform(key, (B, C, T), dtype=jnp.float32)

    in_bytes = x.size * x.dtype.itemsize + u.size * u.dtype.itemsize
    out_bytes = B * T * 4
    cost = pl.CostEstimate(
        flops=4 * B * C * T,
        transcendentals=2 * B * C * T,
        bytes_accessed=in_bytes + out_bytes,
    )

    out = pl.pallas_call(
        _gumbel_argmax_kernel,
        out_shape=jax.ShapeDtypeStruct((B, 1, T), jnp.int32),
        grid=grid,
        in_specs=[
            pl.BlockSpec((1, C, tile_t), lambda b, t: (b, 0, t)),  # logits
            pl.BlockSpec((1, C, tile_t), lambda b, t: (b, 0, t)),  # uniforms
        ],
        out_specs=pl.BlockSpec((1, 1, tile_t), lambda b, t: (b, 0, t)),
        compiler_params=pltpu.CompilerParams(
            dimension_semantics=("parallel", "parallel")),
        cost_estimate=cost,
    )(x, u)

    return out.reshape(B, T)


if __name__ == "__main__":
    key = jax.random.PRNGKey(0)
    B, C, T = 2, 4, 16
    x = jax.random.normal(key, (B, C, T), dtype=jnp.float32)

    samples = categorical_sample(x, seed=1234)
    samples = jax.block_until_ready(samples)

    assert samples.shape == (B, T), samples.shape
    assert samples.dtype == jnp.int32
    assert bool(jnp.all(samples >= 0)) and bool(jnp.all(samples < C))

    # Also exercise the 2-D input path (C, T) -> (1, T).
    samples2 = jax.block_until_ready(categorical_sample(x[0], seed=7))
    assert samples2.shape == (1, T)
    assert bool(jnp.all(samples2 >= 0)) and bool(jnp.all(samples2 < C))

    print("KERNEL_OK")
</pallas_src>

<mosaic_0001>
module attributes {stable_mosaic.version = 11 : i64} {
  func.func @_gumbel_argmax_kernel(%arg0: i32, %arg1: i32, %arg2: memref<1x4x16xf32, #tpu.memory_space<vmem>>, %arg3: memref<1x4x16xf32, #tpu.memory_space<vmem>>, %arg4: memref<1x1x16xi32, #tpu.memory_space<vmem>>) attributes {dimension_semantics = [#tpu.dimension_semantics<parallel>, #tpu.dimension_semantics<parallel>], iteration_bounds = array<i64: 2, 1>, scalar_prefetch = 0 : i64, scratch_operands = 0 : i64, tpu.core_type = #tpu.core_type<tc>, window_params = [{transform_indices = @transform_0, window_bounds = array<i64: 1, 4, 16>}, {transform_indices = @transform_1, window_bounds = array<i64: 1, 4, 16>}, {transform_indices = @transform_2, window_bounds = array<i64: 1, 1, 16>}]} {
    %c0 = arith.constant 0 : index
    %c0_0 = arith.constant 0 : index
    %c0_1 = arith.constant 0 : index
    %0 = vector.load %arg2[%c0, %c0_0, %c0_1] : memref<1x4x16xf32, #tpu.memory_space<vmem>>, vector<1x4x16xf32>
    %1 = vector.shape_cast %0 : vector<1x4x16xf32> to vector<4x16xf32>
    %c0_2 = arith.constant 0 : index
    %c0_3 = arith.constant 0 : index
    %c0_4 = arith.constant 0 : index
    %2 = vector.load %arg3[%c0_2, %c0_3, %c0_4] : memref<1x4x16xf32, #tpu.memory_space<vmem>>, vector<1x4x16xf32>
    %3 = vector.shape_cast %2 : vector<1x4x16xf32> to vector<4x16xf32>
    %cst = arith.constant 1.000000e-07 : f32
    %cst_5 = arith.constant 0.99999988 : f32
    %4 = vector.broadcast %cst : f32 to vector<4x16xf32>
    %5 = arith.maximumf %4, %3 : vector<4x16xf32>
    %6 = vector.broadcast %cst_5 : f32 to vector<4x16xf32>
    %7 = arith.minimumf %6, %5 : vector<4x16xf32>
    %8 = math.log %7 : vector<4x16xf32>
    %cst_6 = arith.constant 0.000000e+00 : f32
    %9 = vector.broadcast %cst_6 : f32 to vector<4x16xf32>
    %10 = arith.subf %9, %8 : vector<4x16xf32>
    %11 = math.log %10 : vector<4x16xf32>
    %cst_7 = arith.constant 0.000000e+00 : f32
    %12 = vector.broadcast %cst_7 : f32 to vector<4x16xf32>
    %13 = arith.subf %12, %11 : vector<4x16xf32>
    %14 = arith.addf %1, %13 : vector<4x16xf32>
    %cst_8 = arith.constant dense<0xFF800000> : vector<16xf32>
    %15 = vector.multi_reduction <maximumf>, %14, %cst_8 [0] : vector<4x16xf32> to vector<16xf32>
    %16 = vector.shape_cast %15 : vector<16xf32> to vector<1x16xf32>
    %17 = tpu.iota {dimensions = array<i32: 0>} : vector<4x16xi32>
    %18 = vector.broadcast %16 : vector<1x16xf32> to vector<4x16xf32>
    %19 = arith.cmpf oeq, %14, %18 : vector<4x16xf32>
    %c4_i32 = arith.constant 4 : i32
    %20 = vector.broadcast %c4_i32 : i32 to vector<4x16xi32>
    %21 = arith.select %19, %17, %20 : vector<4x16xi1>, vector<4x16xi32>
    %cst_9 = arith.constant dense<2147483647> : vector<16xi32>
    %22 = vector.multi_reduction <minsi>, %21, %cst_9 [0] : vector<4x16xi32> to vector<16xi32>
    %23 = vector.shape_cast %22 : vector<16xi32> to vector<1x16xi32>
    %c0_10 = arith.constant 0 : index
    %c0_11 = arith.constant 0 : index
    %c0_12 = arith.constant 0 : index
    %24 = vector.load %arg4[%c0_10, %c0_11, %c0_12] : memref<1x1x16xi32, #tpu.memory_space<vmem>>, vector<1x1x16xi32>
    %25 = vector.shape_cast %24 : vector<1x1x16xi32> to vector<1x16xi32>
    %26 = vector.shape_cast %23 : vector<1x16xi32> to vector<1x1x16xi32>
    tpu.vector_store %arg4[%c0_10, %c0_11, %c0_12], %26 {strides = array<i32>} : memref<1x1x16xi32, #tpu.memory_space<vmem>>, vector<1x1x16xi32>,
    return
  }
  func.func @transform_0(%arg0: i32, %arg1: i32) -> (i32, i32, i32) {
    %c0_i32 = arith.constant 0 : i32
    %c0_i32_0 = arith.constant 0 : i32
    return %arg0, %c0_i32, %arg1 : i32, i32, i32
  }
  func.func @transform_1(%arg0: i32, %arg1: i32) -> (i32, i32, i32) {
    %c0_i32 = arith.constant 0 : i32
    %c0_i32_0 = arith.constant 0 : i32
    return %arg0, %c0_i32, %arg1 : i32, i32, i32
  }
  func.func @transform_2(%arg0: i32, %arg1: i32) -> (i32, i32, i32) {
    %c0_i32 = arith.constant 0 : i32
    %c0_i32_0 = arith.constant 0 : i32
    return %arg0, %c0_i32, %arg1 : i32, i32, i32
  }
}

</mosaic_0001>

<llo_original>
// kernel: tpu_custom_call.1
$region0: #{tpu_custom_call.1}
  #allocation0 [shape = 'u32[]', space=smem, size = 0x4, offset = 0x4, fixed_abs, tag = 'smem constant byte address 0x4 - core index']
  #allocation1 [shape = 'u32[144,128]{1,0:T(1,128)}', space=vmem, size = 0x12000, scoped, tag = 'internal scratch']
  %s0 = inlined_call_operand.hbm [shape: f32[2,4,16], index: 0, kind: input, shape index: {}]
  %s1 = inlined_call_operand.hbm [shape: f32[2,4,16], index: 1, kind: input, shape index: {}]
  %s2 = inlined_call_operand.hbm [shape: s32[2,1,16], index: 2, kind: output, shape index: {}]
  %s3 = sld [smem:[#allocation0]]
  $region49: #{tpu_custom_call.1} parent=0
    _
  %s5 = ssub.s32 1, %s3
  %s6 = scalar_select 0, %s5, %s3
  $region1: #{tpu_custom_call.1} parent=0
    #allocation2 [shape = 'u8[4096]{0}', space=vmem, size = 0x1000, scoped, tag = 'input window, operand 0']
    #allocation3 [shape = 's32[2]{0}', space=sflag, size = 0x8, scoped, tag = 'scoped memory for tpu_custom_call.1']
    #allocation4 [shape = 's32[2]{0}', space=sflag, size = 0x8, scoped, tag = 'scoped memory for tpu_custom_call.1']
    #allocation5 [shape = 'u8[4096]{0}', space=vmem, size = 0x1000, scoped, tag = 'input window, operand 1']
    #allocation6 [shape = 's32[2]{0}', space=sflag, size = 0x8, scoped, tag = 'scoped memory for tpu_custom_call.1']
    #allocation7 [shape = 'u8[1024]{0}', space=vmem, size = 0x400, scoped, tag = 'output window, operand 0']
    %7 = vsyncpa [#allocation3], 0
    %s8 = scalar_lea.sflag [#allocation3], 1
    %9 = vsyncpa %s8, 0
    %10 = vsyncpa [#allocation6], 0
    %s11 = scalar_lea.sflag [#allocation6], 1
    %12 = vsyncpa %s11, 0
    %13 = vsyncpa [#allocation4], 0
    %s14 = scalar_lea.sflag [#allocation4], 1
    %15 = vsyncpa %s14, 0
    loop: start=0, step=1, limit=4
    $region2: #{tpu_custom_call.1} parent=1 // loop_pre_header
      _
    $region3: #{tpu_custom_call.1} parent=1 // loop_header
      %s17 = sphi 0, %s21
      %p18 = scmp.ge.s32.totalorder %s17, 4
      %s24 = sphi 0, %s36
      %s25 = sphi 0, %s32
      %s26 = sphi 0, %s24
      %s27 = sphi 0, %s25
      %s28 = sphi 0, %s26
      %s29 = sphi 0, %s27
      %s41 = sphi 0, %s43
      %s44 = sphi 0, %s41
      %s45 = sphi 0, %s44
      %s61 = sphi 0, %s45
      %s69 = sphi 0, %s71
      %s72 = sphi 0, %s69
      %s73 = sphi 0, %s72
      %s89 = sphi 0, %s73
      %s97 = sphi 0, %s99
      %s100 = sphi 0, %s97
      %s101 = sphi 0, %s100
      %s117 = sphi 0, %s101
    $region4: #{tpu_custom_call.1} parent=1 // loop_header_branch
      %20 = sbr.rel (%p18) target = $region8
    $region5: #{tpu_custom_call.1} parent=1 // loop_body
      %s22 = ssub.s32 %s17, 1
      %s23 = ssub.s32 %s17, 2
      %s30 = sadd.s32 1, %s25
      %p31 = scmp.ge.s32.totalorder %s30, 1
      %s32 = scalar_select %p31, 0, %s30
      %s33 = sadd.s32 1, %s24
      %s34 = scalar_select %p31, %s33, %s24
      %p35 = scmp.ge.s32.totalorder %s34, 2
      %s36 = scalar_select %p35, 0, %s34
      %s37 = ssub.s32 %s24, %s36
      %s38 = ssub.s32 %s25, %s32
      %s39 = sor.u32 %s37, %s38
      %p40 = scmp.eq.s32.totalorder %s39, 0
      %s42 = sadd.s32 %s41, 1
      %s43 = scalar_select %p40, %s41, %s42
      %p46 = pneg %p40
      %p47 = scmp.eq.s32.totalorder %s17, 1
      %p48 = por %p46, %p47
      %p49 = scmp.ne.s32.totalorder %s41, %s44
      %p50 = scmp.eq.s32.totalorder %s17, 0
      %p51 = por %p49, %p50
      %p52 = scmp.ne.s32.totalorder %s41, %s44
      %p53 = scmp.eq.s32.totalorder %s22, 1
      %p54 = por %p52, %p53
      %p55 = scmp.ne.s32.totalorder %s44, %s45
      %p56 = scmp.eq.s32.totalorder %s22, 0
      %p57 = por %p55, %p56
      %p58 = scmp.ne.s32.totalorder %s44, %s45
      %p59 = scmp.eq.s32.totalorder %s23, 1
      %p60 = por %p58, %p59
      %p62 = scmp.ne.s32.totalorder %s45, %s61
      %p63 = scmp.eq.s32.totalorder %s23, 0
      %p64 = por %p62, %p63
      %s65 = ssub.s32 %s24, %s36
      %s66 = ssub.s32 %s25, %s32
      %s67 = sor.u32 %s65, %s66
      %p68 = scmp.eq.s32.totalorder %s67, 0
      %s70 = sadd.s32 %s69, 1
      %s71 = scalar_select %p68, %s69, %s70
      %p74 = pneg %p68
      %p75 = scmp.eq.s32.totalorder %s17, 1
      %p76 = por %p74, %p75
      %p77 = scmp.ne.s32.totalorder %s69, %s72
      %p78 = scmp.eq.s32.totalorder %s17, 0
      %p79 = por %p77, %p78
      %p80 = scmp.ne.s32.totalorder %s69, %s72
      %p81 = scmp.eq.s32.totalorder %s22, 1
      %p82 = por %p80, %p81
      %p83 = scmp.ne.s32.totalorder %s72, %s73
      %p84 = scmp.eq.s32.totalorder %s22, 0
      %p85 = por %p83, %p84
      %p86 = scmp.ne.s32.totalorder %s72, %s73
      %p87 = scmp.eq.s32.totalorder %s23, 1
      %p88 = por %p86, %p87
      %p90 = scmp.ne.s32.totalorder %s73, %s89
      %p91 = scmp.eq.s32.totalorder %s23, 0
      %p92 = por %p90, %p91
      %s93 = ssub.s32 %s24, %s36
      %s94 = ssub.s32 %s25, %s32
      %s95 = sor.u32 %s93, %s94
      %p96 = scmp.eq.s32.totalorder %s95, 0
      %s98 = sadd.s32 %s97, 1
      %s99 = scalar_select %p96, %s97, %s98
      %p102 = pneg %p96
      %p103 = scmp.eq.s32.totalorder %s17, 1
      %p104 = por %p102, %p103
      %p105 = scmp.ne.s32.totalorder %s97, %s100
      %p106 = scmp.eq.s32.totalorder %s17, 0
      %p107 = por %p105, %p106
      %p108 = scmp.ne.s32.totalorder %s97, %s100
      %p109 = scmp.eq.s32.totalorder %s22, 1
      %p110 = por %p108, %p109
      %p111 = scmp.ne.s32.totalorder %s100, %s101
      %p112 = scmp.eq.s32.totalorder %s22, 0
      %p113 = por %p111, %p112
      %p114 = scmp.ne.s32.totalorder %s100, %s101
      %p115 = scmp.eq.s32.totalorder %s23, 1
      %p116 = por %p114, %p115
      %p118 = scmp.ne.s32.totalorder %s101, %s117
      %p119 = scmp.eq.s32.totalorder %s23, 0
      %p120 = por %p118, %p119
      %p121 = scmp.le.s32.totalorder 1, %s17
      %p122 = scmp.lt.s32.totalorder %s17, 3
      %p123 = pnand %p121, %p122
      %p124 = pneg %p123
      // Predicated region
      $region9: #{tpu_custom_call.1} parent=5 // pred_check
        _
      $region10: #{tpu_custom_call.1} parent=5 // pred_check_branch
        %126 = sbr.rel (%p123) target = $region12
      $region11: #{tpu_custom_call.1} parent=5 // pred_region
        %s127 = ssub.s32 %s17, 1
      $region12: #{tpu_custom_call.1} parent=5 // pred_fallthru
        _
      %p128 = scmp.lt.s32.totalorder %s17, 2
      // Predicated region
      $region13: #{tpu_custom_call.1} parent=5 // pred_check
        %p129 = pneg %p128
      $region14: #{tpu_custom_call.1} parent=5 // pred_check_branch
        %131 = sbr.rel (%p129) target = $region16
      $region15: #{tpu_custom_call.1} parent=5 // pred_region
        // Predicated region
        $region17: #{tpu_custom_call.1} parent=15 // pred_check
          %p132 = pneg %p51
        $region18: #{tpu_custom_call.1} parent=15 // pred_check_branch
          %134 = sbr.rel (%p132) target = $region20
        $region19: #{tpu_custom_call.1} parent=15 // pred_region
          %s135 = sand.u32 %s41, 1
          %s136 = scalar_lea.sflag [#allocation3], %s135
          %s137 = sand.u32 %s41, 1
          %s138 = smul.addr %s137, 4
          %s139 = scalar_lea.vmem [#allocation2], %s138
          %s141 = ssub.s32 64, 64
          %142 = vsyncadd %s136, %s141
          %s143 = sadd.s32 %s25, %s24
          %s144 = smul.addr %s143, 64
          %s145 = scalar_lea.hbm %s0, %s144
          %s147 = sshll.u32 %s139, 4
          %s148 = int_to_ptr.vmem [resolvable:$true] %s147
          %150 = dma.hbm_to_vmem [thread:$0]  %s145, 64, %s148, %s136
        $region20: #{tpu_custom_call.1} parent=15 // pred_fallthru
          _
        // Predicated region
        $region21: #{tpu_custom_call.1} parent=15 // pred_check
          %p151 = pneg %p79
        $region22: #{tpu_custom_call.1} parent=15 // pred_check_branch
          %153 = sbr.rel (%p151) target = $region24
        $region23: #{tpu_custom_call.1} parent=15 // pred_region
          %s154 = sand.u32 %s69, 1
          %s155 = scalar_lea.sflag [#allocation6], %s154
          %s156 = sand.u32 %s69, 1
          %s157 = smul.addr %s156, 4
          %s158 = scalar_lea.vmem [#allocation5], %s157
          %s160 = ssub.s32 64, 64
          %161 = vsyncadd %s155, %s160
          %s162 = sadd.s32 %s25, %s24
          %s163 = smul.addr %s162, 64
          %s164 = scalar_lea.hbm %s1, %s163
          %s166 = sshll.u32 %s158, 4
          %s167 = int_to_ptr.vmem [resolvable:$true] %s166
          %169 = dma.hbm_to_vmem [thread:$0]  %s164, 64, %s167, %s155
        $region24: #{tpu_custom_call.1} parent=15 // pred_fallthru
          _
      $region16: #{tpu_custom_call.1} parent=5 // pred_fallthru
        _
      %p170 = scmp.le.s32.totalorder 1, %s17
      %p171 = scmp.lt.s32.totalorder %s17, 3
      %p172 = pnand %p170, %p171
      %p173 = pneg %p172
      // Predicated region
      $region25: #{tpu_custom_call.1} parent=5 // pred_check
        _
      $region26: #{tpu_custom_call.1} parent=5 // pred_check_branch
        %175 = sbr.rel (%p172) target = $region28
      $region27: #{tpu_custom_call.1} parent=5 // pred_region
        %s176 = ssub.s32 %s17, 1
        %s177 = sand.u32 %s44, 1
        %s178 = scalar_lea.sflag [#allocation3], %s177
        %s179 = sand.u32 %s44, 1
        %s180 = smul.addr %s179, 4
        %s181 = scalar_lea.vmem [#allocation2], %s180
        // Predicated region
        $region29: #{tpu_custom_call.1} parent=27 // pred_check
          %p182 = pneg %p57
        $region30: #{tpu_custom_call.1} parent=27 // pred_check_branch
          %184 = sbr.rel (%p182) target = $region32
        $region31: #{tpu_custom_call.1} parent=27 // pred_region
          %185 = dma.done %s178, 64
        $region32: #{tpu_custom_call.1} parent=27 // pred_fallthru
          _
        %s186 = sand.u32 %s72, 1
        %s187 = scalar_lea.sflag [#allocation6], %s186
        %s188 = sand.u32 %s72, 1
        %s189 = smul.addr %s188, 4
        %s190 = scalar_lea.vmem [#allocation5], %s189
        // Predicated region
        $region33: #{tpu_custom_call.1} parent=27 // pred_check
          %p191 = pneg %p85
        $region34: #{tpu_custom_call.1} parent=27 // pred_check_branch
          %193 = sbr.rel (%p191) target = $region36
        $region35: #{tpu_custom_call.1} parent=27 // pred_region
          %194 = dma.done %s187, 64
        $region36: #{tpu_custom_call.1} parent=27 // pred_fallthru
          _
        %s195 = sand.u32 %s44, 1
        %s196 = scalar_lea.sflag [#allocation3], %s195
        %s197 = sand.u32 %s44, 1
        %s198 = smul.addr %s197, 4
        %s199 = scalar_lea.vmem [#allocation2], %s198
        %p200 = pneg %p57
        %p201 = pneg %p54
        %s202 = sand.u32 %s72, 1
        %s203 = scalar_lea.sflag [#allocation6], %s202
        %s204 = sand.u32 %s72, 1
        %s205 = smul.addr %s204, 4
        %s206 = scalar_lea.vmem [#allocation5], %s205
        %p207 = pneg %p85
        %p208 = pneg %p82
        %p209 = pneg %p113
        %p210 = pneg %p110
        %s211 = sand.u32 %s100, 1
        %s212 = scalar_lea.sflag [#allocation4], %s211
        %s213 = sand.u32 %s100, 1
        %s214 = scalar_lea.vmem [#allocation7], %s213
        %v215 = vld [vmem:[%s181] sm:$0xf]
        %v216 = vld [vmem:[%s190] sm:$0xf]
        %v217 = vmax.f32 %v216, 1e-07
        %v218 = vmin.f32 %v217, 0.9999999
        %v219 = vlog2.pop %v218
        %v220 = vmul.f32 %v219, 0.6931472
        %v221 = vsub.f32 0.0, %v220
        %v222 = vlog2.pop %v221
        %v223 = vmul.f32 %v222, 0.6931472
        %v224 = vsub.f32 0.0, %v223
        %v225 = vadd.f32 %v215, %v224
        %vm226 = vcmask 125952
        %v227 = vsel %vm226, %v225, -inf
        %v228 = vrot.slane %v227, 4
        %v229 = vmax.f32 %v227, %v228
        %v230 = vrot.slane %v229, 2
        %v231 = vmax.f32 %v229, %v230
        %v232 = vrot.slane %v231, 1
        %v233 = vmax.f32 %v231, %v232
        %v234 = vlaneseq
        %v235 = vshrl.u32 %v234, 7
        %vm236 = vcmp.eq.f32.partialorder %v225, %v233
        %v237 = vsel %vm236, %v235, 4
        %v238 = vsel %vm226, %v237, 2147483647
        %v239 = vrot.slane %v238, 4
        %vm240 = vcmp.lt.s32.totalorder %v238, %v239
        %v241 = vsel %vm240, %v238, %v239
        %v242 = vrot.slane %v241, 2
        %vm243 = vcmp.lt.s32.totalorder %v241, %v242
        %v244 = vsel %vm243, %v241, %v242
        %v245 = vrot.slane %v244, 1
        %vm246 = vcmp.lt.s32.totalorder %v244, %v245
        %v247 = vsel %vm246, %v244, %v245
        %vm248 = vcmask 122880
        %249 = vst.msk [vmem:[%s214] sm:$0x1] %vm248, %v247
        %s250 = sand.u32 %s100, 1
        %s251 = scalar_lea.sflag [#allocation4], %s250
        %s252 = sand.u32 %s100, 1
        %s253 = scalar_lea.vmem [#allocation7], %s252
        // Predicated region
        $region37: #{tpu_custom_call.1} parent=27 // pred_check
          %p254 = pneg %p110
        $region38: #{tpu_custom_call.1} parent=27 // pred_check_branch
          %256 = sbr.rel (%p254) target = $region40
        $region39: #{tpu_custom_call.1} parent=27 // pred_region
          %s258 = ssub.s32 16, 16
          %259 = vsyncadd %s251, %s258
          %s260 = sadd.s32 %s27, %s26
          %s261 = smul.addr %s260, 16
          %s262 = scalar_lea.hbm %s2, %s261
          %s264 = sshll.u32 %s253, 4
          %s265 = int_to_ptr.vmem [resolvable:$true] %s264
          %267 = dma.vmem_to_hbm [thread:$0]  %s265, 16, %s262, %s251
        $region40: #{tpu_custom_call.1} parent=27 // pred_fallthru
          _
      $region28: #{tpu_custom_call.1} parent=5 // pred_fallthru
        _
      %p268 = scmp.le.s32.totalorder 2, %s17
      // Predicated region
      $region41: #{tpu_custom_call.1} parent=5 // pred_check
        %p269 = pneg %p268
      $region42: #{tpu_custom_call.1} parent=5 // pred_check_branch
        %271 = sbr.rel (%p269) target = $region44
      $region43: #{tpu_custom_call.1} parent=5 // pred_region
        %s272 = ssub.s32 %s17, 2
        // Predicated region
        $region45: #{tpu_custom_call.1} parent=43 // pred_check
          %p273 = pneg %p116
        $region46: #{tpu_custom_call.1} parent=43 // pred_check_branch
          %275 = sbr.rel (%p273) target = $region48
        $region47: #{tpu_custom_call.1} parent=43 // pred_region
          %s276 = sand.u32 %s101, 1
          %s277 = scalar_lea.sflag [#allocation4], %s276
          %s278 = sand.u32 %s101, 1
          %s279 = scalar_lea.vmem [#allocation7], %s278
          %280 = dma.done %s277, 16
        $region48: #{tpu_custom_call.1} parent=43 // pred_fallthru
          _
      $region44: #{tpu_custom_call.1} parent=5 // pred_fallthru
        _
    $region6: #{tpu_custom_call.1} parent=1 // loop_footer
      %s21 = sadd.s32 1, %s17
    $region7: #{tpu_custom_call.1} parent=1 // loop_footer_branch
      %16 = sbr.rel target = $region3
    $region8: #{tpu_custom_call.1} parent=1 // loop_exit
      _
    %281 = vsyncpa [#allocation3], 1
    %s282 = scalar_lea.sflag [#allocation3], 1
    %283 = vsyncpa %s282, 1
    %284 = vsyncpa [#allocation6], 1
    %s285 = scalar_lea.sflag [#allocation6], 1
    %286 = vsyncpa %s285, 1
    %287 = vsyncpa [#allocation4], 1
    %s288 = scalar_lea.sflag [#allocation4], 1
    %289 = vsyncpa %s288, 1

</llo_original>
